<compile_context>
chip_gen: v7x
topology: tpu7x:2x2x1
jax: 0.10.0
libtpu: 0.0.40
codegen_flags: <defaults>
</compile_context>

<pallas_src>
import functools

import jax
import jax.numpy as jnp
from jax.experimental import pallas as pl
from jax.experimental.pallas import tpu as pltpu


def _round_up(x, m):
    return ((x + m - 1) // m) * m


def _choose_tile_rows(num_classes, total_rows, itemsize, target_bytes=4 << 20):
    """Rows (of 128 lanes each) per logits tile: ~4 MiB of logits per buffer."""
    per_row = max(1, num_classes * 128 * itemsize)
    budget = max(1, target_bytes // per_row)
    if budget >= total_rows:
        return total_rows                       # single tile: block == full dim
    tr = max(8, (budget // 8) * 8)              # keep sublane dim a multiple of 8
    return min(tr, total_rows)


def _ce_kernel(pred_ref, tgt_ref, sum_ref, cnt_ref, acc_ref, *,
               ignore_label, num_classes, total_rows, tile_rows):
    """Grid = (batch, par-split, row-tiles).  One step handles a class-major
    (C, tile_rows, 128) logits tile and its (tile_rows, 128) target tile."""
    j = pl.program_id(2)                        # row-tile index within this split

    @pl.when(j == 0)
    def _():
        acc_ref[...] = jnp.zeros_like(acc_ref)

    t = tgt_ref[0, 0]                           # (TR, 128) int32

    if num_classes <= 32:
        # Unrolled class loop: element-wise max / exp-sum across C dense planes,
        # target pick via scalar-constant compares (no (C,TR,128) iota temp).
        m = pred_ref[0, 0].astype(jnp.float32)
        for k in range(1, num_classes):
            m = jnp.maximum(m, pred_ref[0, k].astype(jnp.float32))
        s = jnp.zeros_like(m)
        picked = jnp.zeros_like(m)
        for k in range(num_classes):
            xk = pred_ref[0, k].astype(jnp.float32)
            s = s + jnp.exp(xk - m)
            picked = picked + jnp.where(t == k, xk, 0.0)
    else:
        # Large-C fallback: plane-wise reductions over the leading class axis.
        x = pred_ref[0].astype(jnp.float32)                        # (C, TR, 128)
        m = jnp.max(x, axis=0)
        s = jnp.sum(jnp.exp(x - m[None]), axis=0)
        cls = jax.lax.broadcasted_iota(jnp.int32, x.shape, 0)
        picked = jnp.sum(jnp.where(cls == t[None], x, 0.0), axis=0)

    lse = m + jnp.log(s)                                           # (TR, 128)

    valid = t != ignore_label
    ce = jnp.where(valid, lse - picked, 0.0)                       # (TR, 128)
    cnt = valid.astype(jnp.float32)

    if total_rows % tile_rows == 0:
        # No partial tiles anywhere: plain dense VPU accumulation every step.
        acc_ref[0] += ce
        acc_ref[1] += cnt
    else:
        # Only the very last *global* row-tile is partial; all others pay nothing.
        is_last_global = jnp.logical_and(
            pl.program_id(1) == pl.num_programs(1) - 1,
            j == pl.num_programs(2) - 1)

        @pl.when(jnp.logical_not(is_last_global))
        def _():
            acc_ref[0] += ce
            acc_ref[1] += cnt

        @pl.when(is_last_global)
        def _():
            g = pl.program_id(1) * pl.num_programs(2) + j          # global tile idx
            row = (jax.lax.broadcasted_iota(jnp.int32, t.shape, 0)
                   + g * tile_rows)
            keep = row < total_rows
            acc_ref[0] += jnp.where(keep, ce, 0.0)
            acc_ref[1] += jnp.where(keep, cnt, 0.0)

    @pl.when(j == pl.num_programs(2) - 1)
    def _():
        sum_ref[...] = jnp.sum(acc_ref[0]).reshape(1, 1, 1)
        cnt_ref[...] = jnp.sum(acc_ref[1]).reshape(1, 1, 1)


def cross_entropy_loss(pred, target, *, ignore_label=255, tile_rows=None):
    """Matches nn.CrossEntropyLoss(ignore_index=ignore_label) semantics
    (mean over non-ignored elements) for NCHW logits (or generic (..., C))."""
    if pred.ndim == 4:
        # Keep PyTorch's NCHW layout: class-major, no transpose.
        n_img, c, h, w = pred.shape
        length = h * w
        logits = pred.reshape(n_img, c, length)
        tgt = target.reshape(n_img, length).astype(jnp.int32)
    else:
        # Generic (..., C) fallback: flatten rows, transpose to class-major.
        # (Secondary path; costs one XLA transpose of the logits.)
        c = pred.shape[-1]
        rows = pred.reshape(-1, c)
        length = rows.shape[0]
        logits = rows.T.reshape(1, c, length)
        tgt = target.reshape(1, length).astype(jnp.int32)
        n_img = 1

    # Pad the spatial length to a lane multiple (128); padded pixels get
    # ignore_label targets so they contribute nothing. Free when already aligned.
    length_pad = _round_up(length, 128)
    if length_pad != length:
        logits = jnp.pad(logits, ((0, 0), (0, 0), (0, length_pad - length)))
        tgt = jnp.pad(tgt, ((0, 0), (0, length_pad - length)),
                      constant_values=ignore_label)

    total_rows = length_pad // 128
    logits = logits.reshape(n_img, c, total_rows, 128)   # free metadata reshape
    tgt = tgt.reshape(n_img, 1, total_rows, 128)

    if tile_rows is None:
        tile_rows = _choose_tile_rows(c, total_rows, logits.dtype.itemsize)
    else:
        tile_rows = max(1, min(int(tile_rows), total_rows))
        if tile_rows < total_rows:
            tile_rows = min(max(8, (tile_rows // 8) * 8), total_rows)

    grid_rows = pl.cdiv(total_rows, tile_rows)

    # Extra parallel split of the spatial tiles so both v7x TensorCores get
    # balanced work when the batch axis alone cannot provide it.
    n_par = 2 if (n_img % 2 == 1 and grid_rows % 2 == 0 and grid_rows >= 2) else 1
    tiles_per_par = grid_rows // n_par

    kernel = functools.partial(
        _ce_kernel,
        ignore_label=ignore_label,
        num_classes=c,
        total_rows=total_rows,
        tile_rows=tile_rows,
    )

    elem = n_img * c * length_pad
    cost = pl.CostEstimate(
        flops=8 * elem,
        transcendentals=elem + n_img * length_pad,
        bytes_accessed=(logits.size * logits.dtype.itemsize
                        + tgt.size * 4 + 2 * n_img * n_par * 4),
    )

    # VMEM budget: double-buffered logits + targets, fused accumulator, plus
    # headroom for element-wise f32 temporaries.  Capped at 48 MiB (safe on
    # v7x's 64 MiB physical VMEM as well as v5e/v6e's 128 MiB).
    plane_f32 = tile_rows * 128 * 4
    pred_tile = c * tile_rows * 128 * logits.dtype.itemsize
    tgt_tile = tile_rows * 128 * 4
    vmem_need = 2 * pred_tile + 2 * tgt_tile + 2 * plane_f32 + 10 * plane_f32
    vmem_limit = int(min(48 << 20, max(32 << 20, 2 * vmem_need)))

    pred_spec = pl.BlockSpec(
        (1, c, tile_rows, 128),
        lambda i, p, j: (i, 0, p * tiles_per_par + j, 0))
    tgt_spec = pl.BlockSpec(
        (1, 1, tile_rows, 128),
        lambda i, p, j: (i, 0, p * tiles_per_par + j, 0))
    out_spec = pl.BlockSpec((1, 1, 1), lambda i, p, j: (i * n_par + p, 0, 0))

    sum_n, cnt_n = pl.pallas_call(
        kernel,
        out_shape=(
            jax.ShapeDtypeStruct((n_img * n_par, 1, 1), jnp.float32),
            jax.ShapeDtypeStruct((n_img * n_par, 1, 1), jnp.float32),
        ),
        grid_spec=pltpu.PrefetchScalarGridSpec(
            num_scalar_prefetch=0,
            grid=(n_img, n_par, tiles_per_par),
            in_specs=[pred_spec, tgt_spec],
            out_specs=(out_spec, out_spec),
            scratch_shapes=[
                pltpu.VMEM((2, tile_rows, 128), jnp.float32),  # fused loss/count acc
            ],
        ),
        compiler_params=pltpu.CompilerParams(
            dimension_semantics=("parallel", "parallel", "arbitrary"),
            vmem_limit_bytes=vmem_limit),
        cost_estimate=cost,
    )(logits, tgt)

    # mean over non-ignored elements (0/0 -> nan, same as PyTorch)
    return jnp.sum(sum_n) / jnp.sum(cnt_n)


def _reference_loss(pred, target, ignore_label):
    """Pure-JAX reference matching nn.CrossEntropyLoss(ignore_index=...)."""
    if pred.ndim == 4:
        pred = jnp.transpose(pred, (0, 2, 3, 1))
    c = pred.shape[-1]
    x = pred.reshape(-1, c).astype(jnp.float32)
    t = target.reshape(-1).astype(jnp.int32)
    lse = jax.scipy.special.logsumexp(x, axis=-1)
    picked = jnp.take_along_axis(
        x, jnp.clip(t, 0, c - 1)[:, None], axis=-1)[:, 0]
    valid = t != ignore_label
    loss = jnp.where(valid, lse - picked, 0.0)
    return jnp.sum(loss) / jnp.sum(valid.astype(jnp.float32))


if __name__ == "__main__":
    IGNORE_LABEL = 255          # cfg.dataset.ignore_label (synthetic config)
    N, C, H, W = 2, 4, 16, 16   # small NCHW logits, C classes

    key = jax.random.PRNGKey(0)
    k_pred, k_tgt, k_mask = jax.random.split(key, 3)

    pred = jax.random.normal(k_pred, (N, C, H, W), dtype=jnp.float32)
    labels = jax.random.randint(k_tgt, (N, H, W), 0, C, dtype=jnp.int32)
    # sprinkle some ignore_label pixels
    ignore_mask = jax.random.bernoulli(k_mask, 0.2, (N, H, W))
    target = jnp.where(ignore_mask, IGNORE_LABEL, labels).astype(jnp.int32)

    loss = cross_entropy_loss(pred, target, ignore_label=IGNORE_LABEL)
    loss = jax.block_until_ready(loss)

    ref = _reference_loss(pred, target, IGNORE_LABEL)
    assert jnp.allclose(loss, ref, rtol=1e-5, atol=1e-5), (loss, ref)

    print("KERNEL_OK")
</pallas_src>

<mosaic_0001>
module attributes {stable_mosaic.version = 11 : i64} {
  func.func @_ce_kernel(%arg0: i32, %arg1: i32, %arg2: i32, %arg3: memref<1x4x2x128xf32, #tpu.memory_space<vmem>>, %arg4: memref<1x1x2x128xi32, #tpu.memory_space<vmem>>, %arg5: memref<1x1x1xf32, #tpu.memory_space<vmem>>, %arg6: memref<1x1x1xf32, #tpu.memory_space<vmem>>, %arg7: memref<2x2x128xf32, #tpu.memory_space<vmem>>) attributes {dimension_semantics = [#tpu.dimension_semantics<parallel>, #tpu.dimension_semantics<parallel>, #tpu.dimension_semantics<arbitrary>], iteration_bounds = array<i64: 2, 1, 1>, scalar_prefetch = 0 : i64, scratch_operands = 1 : i64, tpu.core_type = #tpu.core_type<tc>, window_params = [{transform_indices = @transform_0, window_bounds = array<i64: 1, 4, 2, 128>}, {transform_indices = @transform_1, window_bounds = array<i64: 1, 1, 2, 128>}, {transform_indices = @transform_2, window_bounds = array<i64: 1, 1, 1>}, {transform_indices = @transform_3, window_bounds = array<i64: 1, 1, 1>}]} {
    %c0_i32 = arith.constant 0 : i32
    %0 = arith.cmpi eq, %arg2, %c0_i32 : i32
    %1 = arith.extui %0 : i1 to i32
    %c0_i32_0 = arith.constant 0 : i32
    %2 = arith.cmpi ne, %1, %c0_i32_0 : i32
    scf.if %2 {
      %cst_54 = arith.constant 0.000000e+00 : f32
      %82 = vector.broadcast %cst_54 : f32 to vector<2x2x128xf32>
      %c0_55 = arith.constant 0 : index
      %c0_56 = arith.constant 0 : index
      %c0_57 = arith.constant 0 : index
      %83 = vector.load %arg7[%c0_55, %c0_56, %c0_57] : memref<2x2x128xf32, #tpu.memory_space<vmem>>, vector<2x2x128xf32>
      tpu.vector_store %arg7[%c0_55, %c0_56, %c0_57], %82 {strides = array<i32>} : memref<2x2x128xf32, #tpu.memory_space<vmem>>, vector<2x2x128xf32>,
    } else {
    }
    %c0 = arith.constant 0 : index
    %c0_1 = arith.constant 0 : index
    %c0_2 = arith.constant 0 : index
    %c0_3 = arith.constant 0 : index
    %3 = vector.load %arg4[%c0, %c0_1, %c0_2, %c0_3] : memref<1x1x2x128xi32, #tpu.memory_space<vmem>>, vector<1x1x2x128xi32>
    %4 = vector.shape_cast %3 : vector<1x1x2x128xi32> to vector<2x128xi32>
    %c0_4 = arith.constant 0 : index
    %c0_5 = arith.constant 0 : index
    %c0_6 = arith.constant 0 : index
    %c0_7 = arith.constant 0 : index
    %5 = vector.load %arg3[%c0_4, %c0_5, %c0_6, %c0_7] : memref<1x4x2x128xf32, #tpu.memory_space<vmem>>, vector<1x1x2x128xf32>
    %6 = vector.shape_cast %5 : vector<1x1x2x128xf32> to vector<2x128xf32>
    %c0_8 = arith.constant 0 : index
    %c1 = arith.constant 1 : index
    %c0_9 = arith.constant 0 : index
    %c0_10 = arith.constant 0 : index
    %7 = vector.load %arg3[%c0_8, %c1, %c0_9, %c0_10] : memref<1x4x2x128xf32, #tpu.memory_space<vmem>>, vector<1x1x2x128xf32>
    %8 = vector.shape_cast %7 : vector<1x1x2x128xf32> to vector<2x128xf32>
    %9 = arith.maximumf %6, %8 : vector<2x128xf32>
    %c0_11 = arith.constant 0 : index
    %c2 = arith.constant 2 : index
    %c0_12 = arith.constant 0 : index
    %c0_13 = arith.constant 0 : index
    %10 = vector.load %arg3[%c0_11, %c2, %c0_12, %c0_13] : memref<1x4x2x128xf32, #tpu.memory_space<vmem>>, vector<1x1x2x128xf32>
    %11 = vector.shape_cast %10 : vector<1x1x2x128xf32> to vector<2x128xf32>
    %12 = arith.maximumf %9, %11 : vector<2x128xf32>
    %c0_14 = arith.constant 0 : index
    %c3 = arith.constant 3 : index
    %c0_15 = arith.constant 0 : index
    %c0_16 = arith.constant 0 : index
    %13 = vector.load %arg3[%c0_14, %c3, %c0_15, %c0_16] : memref<1x4x2x128xf32, #tpu.memory_space<vmem>>, vector<1x1x2x128xf32>
    %14 = vector.shape_cast %13 : vector<1x1x2x128xf32> to vector<2x128xf32>
    %15 = arith.maximumf %12, %14 : vector<2x128xf32>
    %cst = arith.constant 0.000000e+00 : f32
    %16 = vector.broadcast %cst : f32 to vector<2x128xf32>
    %cst_17 = arith.constant 0.000000e+00 : f32
    %17 = vector.broadcast %cst_17 : f32 to vector<2x128xf32>
    %c0_18 = arith.constant 0 : index
    %c0_19 = arith.constant 0 : index
    %c0_20 = arith.constant 0 : index
    %c0_21 = arith.constant 0 : index
    %18 = vector.load %arg3[%c0_18, %c0_19, %c0_20, %c0_21] : memref<1x4x2x128xf32, #tpu.memory_space<vmem>>, vector<1x1x2x128xf32>
    %19 = vector.shape_cast %18 : vector<1x1x2x128xf32> to vector<2x128xf32>
    %20 = arith.subf %19, %15 : vector<2x128xf32>
    %21 = math.exp %20 : vector<2x128xf32>
    %22 = arith.addf %16, %21 : vector<2x128xf32>
    %c0_i32_22 = arith.constant 0 : i32
    %23 = vector.broadcast %c0_i32_22 : i32 to vector<2x128xi32>
    %24 = arith.cmpi eq, %4, %23 : vector<2x128xi32>
    %cst_23 = arith.constant 0.000000e+00 : f32
    %25 = vector.broadcast %cst_23 : f32 to vector<2x128xf32>
    %26 = arith.select %24, %19, %25 : vector<2x128xi1>, vector<2x128xf32>
    %27 = arith.addf %17, %26 : vector<2x128xf32>
    %c0_24 = arith.constant 0 : index
    %c1_25 = arith.constant 1 : index
    %c0_26 = arith.constant 0 : index
    %c0_27 = arith.constant 0 : index
    %28 = vector.load %arg3[%c0_24, %c1_25, %c0_26, %c0_27] : memref<1x4x2x128xf32, #tpu.memory_space<vmem>>, vector<1x1x2x128xf32>
    %29 = vector.shape_cast %28 : vector<1x1x2x128xf32> to vector<2x128xf32>
    %30 = arith.subf %29, %15 : vector<2x128xf32>
    %31 = math.exp %30 : vector<2x128xf32>
    %32 = arith.addf %22, %31 : vector<2x128xf32>
    %c1_i32 = arith.constant 1 : i32
    %33 = vector.broadcast %c1_i32 : i32 to vector<2x128xi32>
    %34 = arith.cmpi eq, %4, %33 : vector<2x128xi32>
    %cst_28 = arith.constant 0.000000e+00 : f32
    %35 = vector.broadcast %cst_28 : f32 to vector<2x128xf32>
    %36 = arith.select %34, %29, %35 : vector<2x128xi1>, vector<2x128xf32>
    %37 = arith.addf %27, %36 : vector<2x128xf32>
    %c0_29 = arith.constant 0 : index
    %c2_30 = arith.constant 2 : index
    %c0_31 = arith.constant 0 : index
    %c0_32 = arith.constant 0 : index
    %38 = vector.load %arg3[%c0_29, %c2_30, %c0_31, %c0_32] : memref<1x4x2x128xf32, #tpu.memory_space<vmem>>, vector<1x1x2x128xf32>
    %39 = vector.shape_cast %38 : vector<1x1x2x128xf32> to vector<2x128xf32>
    %40 = arith.subf %39, %15 : vector<2x128xf32>
    %41 = math.exp %40 : vector<2x128xf32>
    %42 = arith.addf %32, %41 : vector<2x128xf32>
    %c2_i32 = arith.constant 2 : i32
    %43 = vector.broadcast %c2_i32 : i32 to vector<2x128xi32>
    %44 = arith.cmpi eq, %4, %43 : vector<2x128xi32>
    %cst_33 = arith.constant 0.000000e+00 : f32
    %45 = vector.broadcast %cst_33 : f32 to vector<2x128xf32>
    %46 = arith.select %44, %39, %45 : vector<2x128xi1>, vector<2x128xf32>
    %47 = arith.addf %37, %46 : vector<2x128xf32>
    %c0_34 = arith.constant 0 : index
    %c3_35 = arith.constant 3 : index
    %c0_36 = arith.constant 0 : index
    %c0_37 = arith.constant 0 : index
    %48 = vector.load %arg3[%c0_34, %c3_35, %c0_36, %c0_37] : memref<1x4x2x128xf32, #tpu.memory_space<vmem>>, vector<1x1x2x128xf32>
    %49 = vector.shape_cast %48 : vector<1x1x2x128xf32> to vector<2x128xf32>
    %50 = arith.subf %49, %15 : vector<2x128xf32>
    %51 = math.exp %50 : vector<2x128xf32>
    %52 = arith.addf %42, %51 : vector<2x128xf32>
    %c3_i32 = arith.constant 3 : i32
    %53 = vector.broadcast %c3_i32 : i32 to vector<2x128xi32>
    %54 = arith.cmpi eq, %4, %53 : vector<2x128xi32>
    %cst_38 = arith.constant 0.000000e+00 : f32
    %55 = vector.broadcast %cst_38 : f32 to vector<2x128xf32>
    %56 = arith.select %54, %49, %55 : vector<2x128xi1>, vector<2x128xf32>
    %57 = arith.addf %47, %56 : vector<2x128xf32>
    %58 = math.log %52 : vector<2x128xf32>
    %59 = arith.addf %15, %58 : vector<2x128xf32>
    %c255_i32 = arith.constant 255 : i32
    %60 = vector.broadcast %c255_i32 : i32 to vector<2x128xi32>
    %61 = arith.cmpi ne, %4, %60 : vector<2x128xi32>
    %62 = arith.subf %59, %57 : vector<2x128xf32>
    %cst_39 = arith.constant 0.000000e+00 : f32
    %63 = vector.broadcast %cst_39 : f32 to vector<2x128xf32>
    %64 = arith.select %61, %62, %63 : vector<2x128xi1>, vector<2x128xf32>
    %65 = arith.extui %61 : vector<2x128xi1> to vector<2x128xi32>
    %66 = arith.sitofp %65 : vector<2x128xi32> to vector<2x128xf32>
    %c0_40 = arith.constant 0 : index
    %c0_41 = arith.constant 0 : index
    %c0_42 = arith.constant 0 : index
    %67 = vector.load %arg7[%c0_40, %c0_41, %c0_42] : memref<2x2x128xf32, #tpu.memory_space<vmem>>, vector<1x2x128xf32>
    %68 = vector.shape_cast %67 : vector<1x2x128xf32> to vector<2x128xf32>
    %69 = arith.addf %68, %64 : vector<2x128xf32>
    %c0_43 = arith.constant 0 : index
    %c0_44 = arith.constant 0 : index
    %c0_45 = arith.constant 0 : index
    %70 = vector.load %arg7[%c0_43, %c0_44, %c0_45] : memref<2x2x128xf32, #tpu.memory_space<vmem>>, vector<1x2x128xf32>
    %71 = vector.shape_cast %70 : vector<1x2x128xf32> to vector<2x128xf32>
    %72 = vector.shape_cast %69 : vector<2x128xf32> to vector<1x2x128xf32>
    tpu.vector_store %arg7[%c0_43, %c0_44, %c0_45], %72 {strides = array<i32>} : memref<2x2x128xf32, #tpu.memory_space<vmem>>, vector<1x2x128xf32>,
    %c1_46 = arith.constant 1 : index
    %c0_47 = arith.constant 0 : index
    %c0_48 = arith.constant 0 : index
    %73 = vector.load %arg7[%c1_46, %c0_47, %c0_48] : memref<2x2x128xf32, #tpu.memory_space<vmem>>, vector<1x2x128xf32>
    %74 = vector.shape_cast %73 : vector<1x2x128xf32> to vector<2x128xf32>
    %75 = arith.addf %74, %66 : vector<2x128xf32>
    %c1_49 = arith.constant 1 : index
    %c0_50 = arith.constant 0 : index
    %c0_51 = arith.constant 0 : index
    %76 = vector.load %arg7[%c1_49, %c0_50, %c0_51] : memref<2x2x128xf32, #tpu.memory_space<vmem>>, vector<1x2x128xf32>
    %77 = vector.shape_cast %76 : vector<1x2x128xf32> to vector<2x128xf32>
    %78 = vector.shape_cast %75 : vector<2x128xf32> to vector<1x2x128xf32>
    tpu.vector_store %arg7[%c1_49, %c0_50, %c0_51], %78 {strides = array<i32>} : memref<2x2x128xf32, #tpu.memory_space<vmem>>, vector<1x2x128xf32>,
    %c0_i32_52 = arith.constant 0 : i32
    %79 = arith.cmpi eq, %arg2, %c0_i32_52 : i32
    %80 = arith.extui %79 : i1 to i32
    %c0_i32_53 = arith.constant 0 : i32
    %81 = arith.cmpi ne, %80, %c0_i32_53 : i32
    scf.if %81 {
      %c0_54 = arith.constant 0 : index
      %c0_55 = arith.constant 0 : index
      %c0_56 = arith.constant 0 : index
      %82 = vector.load %arg7[%c0_54, %c0_55, %c0_56] : memref<2x2x128xf32, #tpu.memory_space<vmem>>, vector<1x2x128xf32>
      %83 = vector.shape_cast %82 : vector<1x2x128xf32> to vector<2x128xf32>
      %84 = vector.shape_cast %83 : vector<2x128xf32> to vector<1x2x128xf32>
      %cst_57 = arith.constant dense<0.000000e+00> : vector<1xf32>
      %85 = vector.multi_reduction <add>, %84, %cst_57 [1, 2] : vector<1x2x128xf32> to vector<1xf32>
      %86 = vector.shape_cast %85 : vector<1xf32> to vector<1x1x1xf32>
      %87 = vector.extract %86[0, 0, 0] : f32 from vector<1x1x1xf32>
      %88 = vector.broadcast %87 : f32 to vector<1x1x1xf32>
      %c0_58 = arith.constant 0 : index
      %c0_59 = arith.constant 0 : index
      %c0_60 = arith.constant 0 : index
      %89 = vector.load %arg5[%c0_58, %c0_59, %c0_60] : memref<1x1x1xf32, #tpu.memory_space<vmem>>, vector<1x1x1xf32>
      tpu.vector_store %arg5[%c0_58, %c0_59, %c0_60], %88 {strides = array<i32>} : memref<1x1x1xf32, #tpu.memory_space<vmem>>, vector<1x1x1xf32>,
      %c1_61 = arith.constant 1 : index
      %c0_62 = arith.constant 0 : index
      %c0_63 = arith.constant 0 : index
      %90 = vector.load %arg7[%c1_61, %c0_62, %c0_63] : memref<2x2x128xf32, #tpu.memory_space<vmem>>, vector<1x2x128xf32>
      %91 = vector.shape_cast %90 : vector<1x2x128xf32> to vector<2x128xf32>
      %92 = vector.shape_cast %91 : vector<2x128xf32> to vector<1x2x128xf32>
      %cst_64 = arith.constant dense<0.000000e+00> : vector<1xf32>
      %93 = vector.multi_reduction <add>, %92, %cst_64 [1, 2] : vector<1x2x128xf32> to vector<1xf32>
      %94 = vector.shape_cast %93 : vector<1xf32> to vector<1x1x1xf32>
      %95 = vector.extract %94[0, 0, 0] : f32 from vector<1x1x1xf32>
      %96 = vector.broadcast %95 : f32 to vector<1x1x1xf32>
      %c0_65 = arith.constant 0 : index
      %c0_66 = arith.constant 0 : index
      %c0_67 = arith.constant 0 : index
      %97 = vector.load %arg6[%c0_65, %c0_66, %c0_67] : memref<1x1x1xf32, #tpu.memory_space<vmem>>, vector<1x1x1xf32>
      tpu.vector_store %arg6[%c0_65, %c0_66, %c0_67], %96 {strides = array<i32>} : memref<1x1x1xf32, #tpu.memory_space<vmem>>, vector<1x1x1xf32>,
    } else {
    }
    return
  }
  func.func @transform_0(%arg0: i32, %arg1: i32, %arg2: i32) -> (i32, i32, i32, i32) {
    %c1_i32 = arith.constant 1 : i32
    %0 = arith.muli %arg1, %c1_i32 : i32
    %1 = arith.addi %0, %arg2 : i32
    %c0_i32 = arith.constant 0 : i32
    %c0_i32_0 = arith.constant 0 : i32
    %c0_i32_1 = arith.constant 0 : i32
    return %arg0, %c0_i32, %1, %c0_i32_0 : i32, i32, i32, i32
  }
  func.func @transform_1(%arg0: i32, %arg1: i32, %arg2: i32) -> (i32, i32, i32, i32) {
    %c1_i32 = arith.constant 1 : i32
    %0 = arith.muli %arg1, %c1_i32 : i32
    %1 = arith.addi %0, %arg2 : i32
    %c0_i32 = arith.constant 0 : i32
    %c0_i32_0 = arith.constant 0 : i32
    %c0_i32_1 = arith.constant 0 : i32
    return %arg0, %c0_i32, %1, %c0_i32_0 : i32, i32, i32, i32
  }
  func.func @transform_2(%arg0: i32, %arg1: i32, %arg2: i32) -> (i32, i32, i32) {
    %c1_i32 = arith.constant 1 : i32
    %0 = arith.muli %arg0, %c1_i32 : i32
    %1 = arith.addi %0, %arg1 : i32
    %c0_i32 = arith.constant 0 : i32
    %c0_i32_0 = arith.constant 0 : i32
    %c0_i32_1 = arith.constant 0 : i32
    return %1, %c0_i32, %c0_i32_0 : i32, i32, i32
  }
  func.func @transform_3(%arg0: i32, %arg1: i32, %arg2: i32) -> (i32, i32, i32) {
    %c1_i32 = arith.constant 1 : i32
    %0 = arith.muli %arg0, %c1_i32 : i32
    %1 = arith.addi %0, %arg1 : i32
    %c0_i32 = arith.constant 0 : i32
    %c0_i32_0 = arith.constant 0 : i32
    %c0_i32_1 = arith.constant 0 : i32
    return %1, %c0_i32, %c0_i32_0 : i32, i32, i32
  }
}

</mosaic_0001>

<llo_original>
// kernel: tpu_custom_call.1
$region0: #{tpu_custom_call.1}
  #allocation0 [shape = 'u32[]', space=smem, size = 0x4, offset = 0x4, fixed_abs, tag = 'smem constant byte address 0x4 - core index']
  #allocation1 [shape = 'u32[144,128]{1,0:T(1,128)}', space=vmem, size = 0x12000, scoped, tag = 'internal scratch']
  #allocation2 [shape = 'f32[2,2,128]{2,1,0:T(2,128)}', space=vmem, size = 0x800, scoped, tag = 'scratch operand']
  %s0 = inlined_call_operand.hbm [shape: f32[2,4,2,128], index: 0, kind: input, shape index: {}]
  %s1 = inlined_call_operand.hbm [shape: s32[2,1,2,128], index: 1, kind: input, shape index: {}]
  %s2 = inlined_call_operand.vmem [shape: f32[2,1,1], index: 2, kind: output, shape index: {0}]
  %s3 = inlined_call_operand.vmem [shape: f32[2,1,1], index: 3, kind: output, shape index: {1}]
  %4 = xla_tuple %s2, %s3
  %s5 = sld [smem:[#allocation0]]
  $region65: #{tpu_custom_call.1} parent=0
    _
  %s7 = ssub.s32 1, %s5
  %s8 = scalar_select 0, %s7, %s5
  $region1: #{tpu_custom_call.1} parent=0
    #allocation3 [shape = 'u8[8192]{0}', space=vmem, size = 0x2000, scoped, tag = 'input window, operand 0']
    #allocation4 [shape = 's32[2]{0}', space=sflag, size = 0x8, scoped, tag = 'scoped memory for tpu_custom_call.1']
    #allocation5 [shape = 'u8[2048]{0}', space=vmem, size = 0x800, scoped, tag = 'input window, operand 1']
    #allocation6 [shape = 's32[2]{0}', space=sflag, size = 0x8, scoped, tag = 'scoped memory for tpu_custom_call.1']
    %9 = vsyncpa [#allocation4], 0
    %s10 = scalar_lea.sflag [#allocation4], 1
    %11 = vsyncpa %s10, 0
    %12 = vsyncpa [#allocation6], 0
    %s13 = scalar_lea.sflag [#allocation6], 1
    %14 = vsyncpa %s13, 0
    loop: start=0, step=1, limit=4
    $region2: #{tpu_custom_call.1} parent=1 // loop_pre_header
      _
    $region3: #{tpu_custom_call.1} parent=1 // loop_header
      %s16 = sphi 0, %s20
      %p17 = scmp.ge.s32.totalorder %s16, 4
      %s23 = sphi 0, %s42
      %s24 = sphi 0, %s38
      %s25 = sphi 0, %s34
      %s26 = sphi 0, %s23
      %s27 = sphi 0, %s24
      %s28 = sphi 0, %s25
      %s29 = sphi 0, %s26
      %s30 = sphi 0, %s27
      %s31 = sphi 0, %s28
      %s49 = sphi 0, %s51
      %s52 = sphi 0, %s49
      %s53 = sphi 0, %s52
      %s69 = sphi 0, %s53
      %s79 = sphi 0, %s81
      %s82 = sphi 0, %s79
      %s83 = sphi 0, %s82
      %s99 = sphi 0, %s83
      %s107 = sphi 0, %s109
      %s110 = sphi 0, %s107
      %s111 = sphi 0, %s110
      %s127 = sphi 0, %s111
      %s135 = sphi 0, %s137
      %s138 = sphi 0, %s135
      %s139 = sphi 0, %s138
      %s155 = sphi 0, %s139
    $region4: #{tpu_custom_call.1} parent=1 // loop_header_branch
      %19 = sbr.rel (%p17) target = $region8
    $region5: #{tpu_custom_call.1} parent=1 // loop_body
      %s21 = ssub.s32 %s16, 1
      %s22 = ssub.s32 %s16, 2
      %s32 = sadd.s32 1, %s25
      %p33 = scmp.ge.s32.totalorder %s32, 1
      %s34 = scalar_select %p33, 0, %s32
      %s35 = sadd.s32 1, %s24
      %s36 = scalar_select %p33, %s35, %s24
      %p37 = scmp.ge.s32.totalorder %s36, 1
      %s38 = scalar_select %p37, 0, %s36
      %s39 = sadd.s32 1, %s23
      %s40 = scalar_select %p37, %s39, %s23
      %p41 = scmp.ge.s32.totalorder %s40, 2
      %s42 = scalar_select %p41, 0, %s40
      %s43 = sadd.s32 %s24, %s25
      %s44 = sadd.s32 %s38, %s34
      %s45 = ssub.s32 %s23, %s42
      %s46 = ssub.s32 %s43, %s44
      %s47 = sor.u32 %s45, %s46
      %p48 = scmp.eq.s32.totalorder %s47, 0
      %s50 = sadd.s32 %s49, 1
      %s51 = scalar_select %p48, %s49, %s50
      %p54 = pneg %p48
      %p55 = scmp.eq.s32.totalorder %s16, 1
      %p56 = por %p54, %p55
      %p57 = scmp.ne.s32.totalorder %s49, %s52
      %p58 = scmp.eq.s32.totalorder %s16, 0
      %p59 = por %p57, %p58
      %p60 = scmp.ne.s32.totalorder %s49, %s52
      %p61 = scmp.eq.s32.totalorder %s21, 1
      %p62 = por %p60, %p61
      %p63 = scmp.ne.s32.totalorder %s52, %s53
      %p64 = scmp.eq.s32.totalorder %s21, 0
      %p65 = por %p63, %p64
      %p66 = scmp.ne.s32.totalorder %s52, %s53
      %p67 = scmp.eq.s32.totalorder %s22, 1
      %p68 = por %p66, %p67
      %p70 = scmp.ne.s32.totalorder %s53, %s69
      %p71 = scmp.eq.s32.totalorder %s22, 0
      %p72 = por %p70, %p71
      %s73 = sadd.s32 %s24, %s25
      %s74 = sadd.s32 %s38, %s34
      %s75 = ssub.s32 %s23, %s42
      %s76 = ssub.s32 %s73, %s74
      %s77 = sor.u32 %s75, %s76
      %p78 = scmp.eq.s32.totalorder %s77, 0
      %s80 = sadd.s32 %s79, 1
      %s81 = scalar_select %p78, %s79, %s80
      %p84 = pneg %p78
      %p85 = scmp.eq.s32.totalorder %s16, 1
      %p86 = por %p84, %p85
      %p87 = scmp.ne.s32.totalorder %s79, %s82
      %p88 = scmp.eq.s32.totalorder %s16, 0
      %p89 = por %p87, %p88
      %p90 = scmp.ne.s32.totalorder %s79, %s82
      %p91 = scmp.eq.s32.totalorder %s21, 1
      %p92 = por %p90, %p91
      %p93 = scmp.ne.s32.totalorder %s82, %s83
      %p94 = scmp.eq.s32.totalorder %s21, 0
      %p95 = por %p93, %p94
      %p96 = scmp.ne.s32.totalorder %s82, %s83
      %p97 = scmp.eq.s32.totalorder %s22, 1
      %p98 = por %p96, %p97
      %p100 = scmp.ne.s32.totalorder %s83, %s99
      %p101 = scmp.eq.s32.totalorder %s22, 0
      %p102 = por %p100, %p101
      %s103 = sadd.s32 %s23, %s24
      %s104 = sadd.s32 %s42, %s38
      %s105 = ssub.s32 %s103, %s104
      %p106 = scmp.eq.s32.totalorder %s105, 0
      %s108 = sadd.s32 %s107, 1
      %s109 = scalar_select %p106, %s107, %s108
      %p112 = pneg %p106
      %p113 = scmp.eq.s32.totalorder %s16, 1
      %p114 = por %p112, %p113
      %p115 = scmp.ne.s32.totalorder %s107, %s110
      %p116 = scmp.eq.s32.totalorder %s16, 0
      %p117 = por %p115, %p116
      %p118 = scmp.ne.s32.totalorder %s107, %s110
      %p119 = scmp.eq.s32.totalorder %s21, 1
      %p120 = por %p118, %p119
      %p121 = scmp.ne.s32.totalorder %s110, %s111
      %p122 = scmp.eq.s32.totalorder %s21, 0
      %p123 = por %p121, %p122
      %p124 = scmp.ne.s32.totalorder %s110, %s111
      %p125 = scmp.eq.s32.totalorder %s22, 1
      %p126 = por %p124, %p125
      %p128 = scmp.ne.s32.totalorder %s111, %s127
      %p129 = scmp.eq.s32.totalorder %s22, 0
      %p130 = por %p128, %p129
      %s131 = sadd.s32 %s23, %s24
      %s132 = sadd.s32 %s42, %s38
      %s133 = ssub.s32 %s131, %s132
      %p134 = scmp.eq.s32.totalorder %s133, 0
      %s136 = sadd.s32 %s135, 1
      %s137 = scalar_select %p134, %s135, %s136
      %p140 = pneg %p134
      %p141 = scmp.eq.s32.totalorder %s16, 1
      %p142 = por %p140, %p141
      %p143 = scmp.ne.s32.totalorder %s135, %s138
      %p144 = scmp.eq.s32.totalorder %s16, 0
      %p145 = por %p143, %p144
      %p146 = scmp.ne.s32.totalorder %s135, %s138
      %p147 = scmp.eq.s32.totalorder %s21, 1
      %p148 = por %p146, %p147
      %p149 = scmp.ne.s32.totalorder %s138, %s139
      %p150 = scmp.eq.s32.totalorder %s21, 0
      %p151 = por %p149, %p150
      %p152 = scmp.ne.s32.totalorder %s138, %s139
      %p153 = scmp.eq.s32.totalorder %s22, 1
      %p154 = por %p152, %p153
      %p156 = scmp.ne.s32.totalorder %s139, %s155
      %p157 = scmp.eq.s32.totalorder %s22, 0
      %p158 = por %p156, %p157
      %p159 = scmp.le.s32.totalorder 1, %s16
      %p160 = scmp.lt.s32.totalorder %s16, 3
      %p161 = pnand %p159, %p160
      %p162 = pneg %p161
      // Predicated region
      $region9: #{tpu_custom_call.1} parent=5 // pred_check
        _
      $region10: #{tpu_custom_call.1} parent=5 // pred_check_branch
        %164 = sbr.rel (%p161) target = $region12
      $region11: #{tpu_custom_call.1} parent=5 // pred_region
        %s165 = ssub.s32 %s16, 1
      $region12: #{tpu_custom_call.1} parent=5 // pred_fallthru
        _
      %p166 = scmp.lt.s32.totalorder %s16, 2
      // Predicated region
      $region13: #{tpu_custom_call.1} parent=5 // pred_check
        %p167 = pneg %p166
      $region14: #{tpu_custom_call.1} parent=5 // pred_check_branch
        %169 = sbr.rel (%p167) target = $region16
      $region15: #{tpu_custom_call.1} parent=5 // pred_region
        // Predicated region
        $region17: #{tpu_custom_call.1} parent=15 // pred_check
          %p170 = pneg %p59
        $region18: #{tpu_custom_call.1} parent=15 // pred_check_branch
          %172 = sbr.rel (%p170) target = $region20
        $region19: #{tpu_custom_call.1} parent=15 // pred_region
          %s173 = sand.u32 %s49, 1
          %s174 = scalar_lea.sflag [#allocation4], %s173
          %s175 = sand.u32 %s49, 1
          %s176 = smul.addr %s175, 8
          %s177 = scalar_lea.vmem [#allocation3], %s176
          %s178 = sadd.s32 %s24, %s25
          %s180 = ssub.s32 128, 128
          %181 = vsyncadd %s174, %s180
          %s182 = smul.addr %s23, 4
          %s183 = sadd.s32 %s178, %s182
          %s184 = smul.addr %s183, 32
          %s185 = scalar_lea.hbm %s0, %s184
          %s186 = sshll.u32 %s177, 4
          %s187 = int_to_ptr.vmem [resolvable:$true] %s186
          %192 = dma.hbm_to_vmem [thread:$0]  %s185, 128, %s187, %s174, 32, 32, 2
        $region20: #{tpu_custom_call.1} parent=15 // pred_fallthru
          _
        // Predicated region
        $region21: #{tpu_custom_call.1} parent=15 // pred_check
          %p193 = pneg %p89
        $region22: #{tpu_custom_call.1} parent=15 // pred_check_branch
          %195 = sbr.rel (%p193) target = $region24
        $region23: #{tpu_custom_call.1} parent=15 // pred_region
          %s196 = sand.u32 %s79, 1
          %s197 = scalar_lea.sflag [#allocation6], %s196
          %s198 = sand.u32 %s79, 1
          %s199 = smul.addr %s198, 2
          %s200 = scalar_lea.vmem [#allocation5], %s199
          %s201 = sadd.s32 %s24, %s25
          %s203 = ssub.s32 32, 32
          %204 = vsyncadd %s197, %s203
          %s205 = sadd.s32 %s201, %s23
          %s206 = smul.addr %s205, 32
          %s207 = scalar_lea.hbm %s1, %s206
          %s209 = sshll.u32 %s200, 4
          %s210 = int_to_ptr.vmem [resolvable:$true] %s209
          %212 = dma.hbm_to_vmem [thread:$0]  %s207, 32, %s210, %s197
        $region24: #{tpu_custom_call.1} parent=15 // pred_fallthru
          _
      $region16: #{tpu_custom_call.1} parent=5 // pred_fallthru
        _
      %p213 = scmp.le.s32.totalorder 1, %s16
      %p214 = scmp.lt.s32.totalorder %s16, 3
      %p215 = pnand %p213, %p214
      %p216 = pneg %p215
      // Predicated region
      $region25: #{tpu_custom_call.1} parent=5 // pred_check
        _
      $region26: #{tpu_custom_call.1} parent=5 // pred_check_branch
        %218 = sbr.rel (%p215) target = $region28
      $region27: #{tpu_custom_call.1} parent=5 // pred_region
        %s219 = ssub.s32 %s16, 1
        %s220 = sand.u32 %s52, 1
        %s221 = scalar_lea.sflag [#allocation4], %s220
        %s222 = sand.u32 %s52, 1
        %s223 = smul.addr %s222, 8
        %s224 = scalar_lea.vmem [#allocation3], %s223
        // Predicated region
        $region29: #{tpu_custom_call.1} parent=27 // pred_check
          %p225 = pneg %p65
        $region30: #{tpu_custom_call.1} parent=27 // pred_check_branch
          %227 = sbr.rel (%p225) target = $region32
        $region31: #{tpu_custom_call.1} parent=27 // pred_region
          %228 = dma.done %s221, 128
        $region32: #{tpu_custom_call.1} parent=27 // pred_fallthru
          _
        %s229 = sand.u32 %s82, 1
        %s230 = scalar_lea.sflag [#allocation6], %s229
        %s231 = sand.u32 %s82, 1
        %s232 = smul.addr %s231, 2
        %s233 = scalar_lea.vmem [#allocation5], %s232
        // Predicated region
        $region33: #{tpu_custom_call.1} parent=27 // pred_check
          %p234 = pneg %p95
        $region34: #{tpu_custom_call.1} parent=27 // pred_check_branch
          %236 = sbr.rel (%p234) target = $region36
        $region35: #{tpu_custom_call.1} parent=27 // pred_region
          %237 = dma.done %s230, 32
        $region36: #{tpu_custom_call.1} parent=27 // pred_fallthru
          _
        %s238 = sand.u32 %s52, 1
        %s239 = scalar_lea.sflag [#allocation4], %s238
        %s240 = sand.u32 %s52, 1
        %s241 = smul.addr %s240, 8
        %s242 = scalar_lea.vmem [#allocation3], %s241
        %p243 = pneg %p65
        %p244 = pneg %p62
        %s245 = sand.u32 %s82, 1
        %s246 = scalar_lea.sflag [#allocation6], %s245
        %s247 = sand.u32 %s82, 1
        %s248 = smul.addr %s247, 2
        %s249 = scalar_lea.vmem [#allocation5], %s248
        %p250 = pneg %p95
        %p251 = pneg %p92
        %p252 = pneg %p123
        %p253 = pneg %p120
        %s254 = sadd.s32 %s26, %s27
        %p255 = scmp.lt.s32.totalorder %s254, 1
        %s256 = scalar_select %p255, %s254, 1
        %s257 = scalar_lea.vmem %s2, %s256
        %p258 = pneg %p151
        %p259 = pneg %p148
        %s260 = sadd.s32 %s26, %s27
        %p261 = scmp.lt.s32.totalorder %s260, 1
        %s262 = scalar_select %p261, %s260, 1
        %s263 = scalar_lea.vmem %s3, %s262
        %s264 = sadd.s32 %s27, %s28
        %s265 = sadd.s32 %s27, %s28
        %s266 = sadd.s32 %s26, %s27
        %p267 = scmp.lt.s32.totalorder %s266, 1
        %s268 = scalar_select %p267, %s266, 1
        %s269 = scalar_lea.vmem %s2, %s268
        %s270 = sadd.s32 %s26, %s27
        %s271 = sadd.s32 %s26, %s27
        %p272 = scmp.lt.s32.totalorder %s271, 1
        %s273 = scalar_select %p272, %s271, 1
        %s274 = scalar_lea.vmem %s3, %s273
        %s275 = sadd.s32 %s26, %s27
        %p276 = scmp.eq.s32.totalorder %s28, 0
        // Predicated region
        $region37: #{tpu_custom_call.1} parent=27 // pred_check
          %p277 = pneg %p276
        $region38: #{tpu_custom_call.1} parent=27 // pred_check_branch
          %279 = sbr.rel (%p277) target = $region40
        $region39: #{tpu_custom_call.1} parent=27 // pred_region
          %280 = vst [vmem:[#allocation2] sm:$0x3] 0.0
          %281 = vst [vmem:[#allocation2 + $0x2] sm:$0x3] 0.0
        $region40: #{tpu_custom_call.1} parent=27 // pred_fallthru
          _
        %v282 = vld [vmem:[%s233] sm:$0x3]
        %v283 = vld [vmem:[%s224] sm:$0x3]
        %s284 = scalar_lea.vmem %s224, 2 [#allocation3]
        %v285 = vld [vmem:[%s284] sm:$0x3]
        %v286 = vmax.f32 %v283, %v285
        %s287 = scalar_lea.vmem %s224, 4 [#allocation3]
        %v288 = vld [vmem:[%s287] sm:$0x3]
        %v289 = vmax.f32 %v286, %v288
        %s290 = scalar_lea.vmem %s224, 6 [#allocation3]
        %v291 = vld [vmem:[%s290] sm:$0x3]
        %v292 = vmax.f32 %v289, %v291
        %v293 = vsub.f32 %v283, %v292
        %v294 = vmul.f32 %v293, 1.442695
        %v295 = vpow.pop %v294
        %v296 = vadd.f32 %v295, 0.0
        %vm297 = vcmp.eq.s32.totalorder %v282, 0
        %v298 = vsel %vm297, %v283, 0.0
        %v299 = vadd.f32 %v298, 0.0
        %v300 = vsub.f32 %v285, %v292
        %v301 = vmul.f32 %v300, 1.442695
        %v302 = vpow.pop %v301
        %v303 = vadd.f32 %v296, %v302
        %vm304 = vcmp.eq.s32.totalorder %v282, 1
        %v305 = vsel %vm304, %v285, 0.0
        %v306 = vadd.f32 %v299, %v305
        %v307 = vsub.f32 %v288, %v292
        %v308 = vmul.f32 %v307, 1.442695
        %v309 = vpow.pop %v308
        %v310 = vadd.f32 %v303, %v309
        %vm311 = vcmp.eq.s32.totalorder %v282, 2
        %v312 = vsel %vm311, %v288, 0.0
        %v313 = vadd.f32 %v306, %v312
        %v314 = vsub.f32 %v291, %v292
        %v315 = vmul.f32 %v314, 1.442695
        %v316 = vpow.pop %v315
        %v317 = vadd.f32 %v310, %v316
        %vm318 = vcmp.eq.s32.totalorder %v282, 3
        %v319 = vsel %vm318, %v291, 0.0
        %v320 = vadd.f32 %v313, %v319
        %v321 = vlog2.pop %v317
        %v322 = vmul.f32 %v321, 0.6931472
        %v323 = vadd.f32 %v292, %v322
        %vm324 = vcmp.ne.s32.totalorder %v282, 255
        %v325 = vsub.f32 %v323, %v320
        %v326 = vsel %vm324, %v325, 0.0
        %v327 = vsel %vm324, 1, 0
        %v328 = vcvt.s32.f32 %v327
        %v329 = vld [vmem:[#allocation2] sm:$0x3]
        %v330 = vadd.f32 %v329, %v326
        %331 = vst [vmem:[#allocation2] sm:$0x3] %v330
        %s332 = scalar_lea.vmem [#allocation2], 2
        %v333 = vld [vmem:[%s332] sm:$0x3]
        %v334 = vadd.f32 %v333, %v328
        %335 = vst [vmem:[%s332] sm:$0x3] %v334
        // Predicated region
        $region41: #{tpu_custom_call.1} parent=27 // pred_check
          %p336 = pneg %p276
        $region42: #{tpu_custom_call.1} parent=27 // pred_check_branch
          %338 = sbr.rel (%p336) target = $region44
        $region43: #{tpu_custom_call.1} parent=27 // pred_region
          %v339 = vld [vmem:[#allocation2] sm:$0x3]
          %vm340 = vcmask 1041408
          %v341 = vsel %vm340, %v339, 0.0
          %342 = vadd.xlane.f32.xlu0 %v341
          %v343 = vpop.xlane.xlu0 %342
          %v344 = vrot.slane %v343, 4
          %v345 = vadd.f32 %v343, %v344
          %v346 = vrot.slane %v345, 2
          %v347 = vadd.f32 %v345, %v346
          %v348 = vrot.slane %v347, 1
          %v349 = vadd.f32 %v347, %v348
          %s350 = vtos %v349
          %v351 = vstv %s350
          %vm352 = vcmask 0
          %353 = vst.msk [vmem:[%s269] sm:$0x1] %vm352, %v351
          %v354 = vld [vmem:[%s332] sm:$0x3]
          %v355 = vsel %vm340, %v354, 0.0
          %356 = vadd.xlane.f32.xlu0 %v355
          %v357 = vpop.xlane.xlu0 %356
          %v358 = vrot.slane %v357, 4
          %v359 = vadd.f32 %v357, %v358
          %v360 = vrot.slane %v359, 2
          %v361 = vadd.f32 %v359, %v360
          %v362 = vrot.slane %v361, 1
          %v363 = vadd.f32 %v361, %v362
          %s364 = vtos %v363
          %v365 = vstv %s364
          %366 = vst.msk [vmem:[%s274] sm:$0x1] %vm352, %v365
        $region44: #{tpu_custom_call.1} parent=27 // pred_fallthru
          _
        %s367 = sadd.s32 %s26, %s27
        %p368 = scmp.lt.s32.totalorder %s367, 1
        %s369 = scalar_select %p368, %s367, 1
        %s370 = scalar_lea.vmem %s2, %s369
        %s371 = sadd.s32 %s26, %s27
        %p372 = scmp.lt.s32.totalorder %s371, 1
        %s373 = scalar_select %p372, %s371, 1
        %s374 = scalar_lea.vmem %s3, %s373
        // Predicated region
        $region45: #{tpu_custom_call.1} parent=27 // pred_check
          %p375 = pneg %p120
        $region46: #{tpu_custom_call.1} parent=27 // pred_check_branch
          %377 = sbr.rel (%p375) target = $region48
        $region47: #{tpu_custom_call.1} parent=27 // pred_region
          %s378 = sadd.s32 %s26, %s27
        $region48: #{tpu_custom_call.1} parent=27 // pred_fallthru
          _
        // Predicated region
        $region49: #{tpu_custom_call.1} parent=27 // pred_check
          %p379 = pneg %p148
        $region50: #{tpu_custom_call.1} parent=27 // pred_check_branch
          %381 = sbr.rel (%p379) target = $region52
        $region51: #{tpu_custom_call.1} parent=27 // pred_region
          %s382 = sadd.s32 %s26, %s27
        $region52: #{tpu_custom_call.1} parent=27 // pred_fallthru
          _
      $region28: #{tpu_custom_call.1} parent=5 // pred_fallthru
        _
      %p383 = scmp.le.s32.totalorder 2, %s16
      // Predicated region
      $region53: #{tpu_custom_call.1} parent=5 // pred_check
        %p384 = pneg %p383
      $region54: #{tpu_custom_call.1} parent=5 // pred_check_branch
        %386 = sbr.rel (%p384) target = $region56
      $region55: #{tpu_custom_call.1} parent=5 // pred_region
        %s387 = ssub.s32 %s16, 2
        // Predicated region
        $region57: #{tpu_custom_call.1} parent=55 // pred_check
          %p388 = pneg %p126
        $region58: #{tpu_custom_call.1} parent=55 // pred_check_branch
          %390 = sbr.rel (%p388) target = $region60
        $region59: #{tpu_custom_call.1} parent=55 // pred_region
          %s391 = sadd.s32 %s29, %s30
          %p392 = scmp.lt.s32.totalorder %s391, 1
          %s393 = scalar_select %p392, %s391, 1
          %s394 = scalar_lea.vmem %s2, %s393
        $region60: #{tpu_custom_call.1} parent=55 // pred_fallthru
          _
        // Predicated region
        $region61: #{tpu_custom_call.1} parent=55 // pred_check
          %p395 = pneg %p154
        $region62: #{tpu_custom_call.1} parent=55 // pred_check_branch
          %397 = sbr.rel (%p395) target = $region64
        $region63: #{tpu_custom_call.1} parent=55 // pred_region
          %s398 = sadd.s32 %s29, %s30
          %p399 = scmp.lt.s32.totalorder %s398, 1
          %s400 = scalar_select %p399, %s398, 1
          %s401 = scalar_lea.vmem %s3, %s400
        $region64: #{tpu_custom_call.1} parent=55 // pred_fallthru
          _
      $region56: #{tpu_custom_call.1} parent=5 // pred_fallthru
        _
    $region6: #{tpu_custom_call.1} parent=1 // loop_footer
      %s20 = sadd.s32 1, %s16
    $region7: #{tpu_custom_call.1} parent=1 // loop_footer_branch
      %15 = sbr.rel target = $region3
    $region8: #{tpu_custom_call.1} parent=1 // loop_exit
      _
    %402 = vsyncpa [#allocation4], 1
    %s403 = scalar_lea.sflag [#allocation4], 1
    %404 = vsyncpa %s403, 1
    %405 = vsyncpa [#allocation6], 1
    %s406 = scalar_lea.sflag [#allocation6], 1
    %407 = vsyncpa %s406, 1

</llo_original>
